<compile_context>
chip_gen: v7x
topology: tpu7x:2x2x1
jax: 0.10.0
libtpu: 0.0.40
codegen_flags: <defaults>
</compile_context>

<pallas_src>
import functools

import jax
import jax.numpy as jnp
import numpy as np
from jax import lax
from jax.experimental import pallas as pl
from jax.experimental.pallas import tpu as pltpu


def _attention_kernel(x_ref, w_ref, o_ref, *, num_heads, seq_len):
    """x_ref: (Bt*N, C) bf16 slab; w_ref: (C, 3C) bf16 (scale folded into the
    q columns); o_ref: (Bt*N, C) f32 slab."""
    M, C = x_ref.shape
    N = seq_len
    Bt = M // N
    H = num_heads
    hd = C // H

    # Fused QKV projection: one MXU pass over all Bt*N rows with a 3x-wide RHS
    # (bf16 operands, f32 accumulation).
    qkv = jnp.dot(x_ref[...], w_ref[...],
                  preferred_element_type=jnp.float32)                 # (M, 3C) f32

    # Single slab cast for the MXU operands of the attention matmuls; the
    # q/k/v column splits are hoisted out of the batch loop. Softmax and all
    # other elementwise math stays f32 (no bf16 VPU/EUP on v5e).
    qkv_bf = qkv.astype(jnp.bfloat16)
    q = qkv_bf[:, 0 * C:1 * C]        # already carries the attention scale
    k = qkv_bf[:, 1 * C:2 * C]
    v = qkv_bf[:, 2 * C:3 * C]

    # Static unrolled loops: Bt and H are tiny at the deployed PGIB shapes.
    # TODO(synk): for large N/H switch to lax.fori_loop + a VMEM scratch
    #             accumulator (static Python loops do not bound live ranges).
    row_blocks = []
    for b in range(Bt):
        rs = slice(b * N, (b + 1) * N)        # static slice: zero runtime cost
        head_outs = []
        for h in range(H):
            cs = slice(h * hd, (h + 1) * hd)  # static slice: zero runtime cost
            qh = q[rs, cs]
            kh = k[rs, cs]
            # Contract the last dim of both operands: no explicit k^T is
            # materialized before the MXU.
            s = lax.dot_general(qh, kh, (((1,), (1,)), ((), ())),
                                preferred_element_type=jnp.float32)   # (N, N) f32
            s = s - jnp.max(s, axis=-1, keepdims=True)
            p = jnp.exp(s)
            # approx=True -> EUP vrcp (otherwise-idle slot), not a VALU divide.
            p = p * pl.reciprocal(jnp.sum(p, axis=-1, keepdims=True), approx=True)
            # attn_drop is identity in eval mode.
            oh = jnp.dot(p.astype(jnp.bfloat16), v[rs, cs],
                         preferred_element_type=jnp.float32)          # (N, hd) f32
            head_outs.append(oh)
        # Per batch row: heads concatenated back to (N, C) — matches
        # (attn @ v).transpose(1, 2).reshape(B, N, C).
        row_blocks.append(jnp.concatenate(head_outs, axis=-1))

    # ONE dense (Bt*N, C) store instead of Bt masked per-row stores.
    o_ref[...] = jnp.concatenate(row_blocks, axis=0).astype(o_ref.dtype)


def prepare_qkv_weight(w_qkv, *, num_heads=1):
    """Pack PyTorch nn.Linear(dim, 3*dim, bias=False).weight — shape (3C, C) —
    into the kernel's (C, 3C) bf16 slab with the attention scale folded into
    the q columns. Call ONCE at parameter-load time (hoisted off the forward
    latency path)."""
    three_c, C = w_qkv.shape
    assert three_c == 3 * C and C % num_heads == 0
    scale = (C // num_heads) ** (-0.5)
    w = jnp.transpose(w_qkv)                  # (C, 3C); matches y = x @ W.T
    w = w.at[:, :C].multiply(scale)           # fold softmax scale into q cols
    return w.astype(jnp.bfloat16)


def _default_grid_splits(batch):
    """grid=(1,) on single-TensorCore chips (v5e/v6e); a 2-way 'parallel'
    split only on dual-TC v7x, and only when it divides the batch evenly."""
    try:
        kind = jax.devices()[0].device_kind.lower()
    except Exception:
        kind = ""
    if "v7" in kind and batch >= 2 and batch % 2 == 0:
        return 2
    return 1


def attention_forward(x, w_packed, *, num_heads=1, grid_splits=None):
    """x: (B, N, C) float32; w_packed: (C, 3C) bf16 from prepare_qkv_weight."""
    B, N, C = x.shape
    assert C % num_heads == 0
    assert w_packed.shape == (C, 3 * C)

    if grid_splits is None:
        grid_splits = _default_grid_splits(B)
    grid_splits = max(1, min(grid_splits, B))
    while B % grid_splits:                    # guard odd/prime B
        grid_splits -= 1
    rows_per_block = (B // grid_splits) * N

    # 2-D (B*N, C) slab I/O: the outside reshape is metadata-only; the kernel
    # never reshapes and stores one dense block per grid step.
    # TODO(synk): when C < 128, a (B, N*C) lane-dense output layout could
    #             remove the masked vst.msk stores — benchmark before adopting.
    xb = x.reshape(B * N, C).astype(jnp.bfloat16)

    kernel = functools.partial(_attention_kernel, num_heads=num_heads, seq_len=N)

    out2d = pl.pallas_call(
        kernel,
        out_shape=jax.ShapeDtypeStruct((B * N, C), x.dtype),
        grid_spec=pltpu.PrefetchScalarGridSpec(
            num_scalar_prefetch=0,
            grid=(grid_splits,),
            in_specs=[
                pl.BlockSpec((rows_per_block, C), lambda b: (b, 0)),
                # Grid-invariant weight slab (constant index_map).
                pl.BlockSpec((C, 3 * C), lambda b: (0, 0)),
            ],
            out_specs=pl.BlockSpec((rows_per_block, C), lambda b: (b, 0)),
        ),
        compiler_params=pltpu.CompilerParams(
            dimension_semantics=("parallel",),
        ),
    )(xb, w_packed)
    return out2d.reshape(B, N, C)


def attention_reference(x, w_qkv, *, num_heads=1):
    """Pure-JAX (f32) reference mirroring the PyTorch forward exactly."""
    B, N, C = x.shape
    hd = C // num_heads
    scale = hd ** (-0.5)
    qkv = jnp.einsum("bnc,dc->bnd", x, w_qkv)                     # nn.Linear: x @ W.T
    qkv = qkv.reshape(B, N, 3, num_heads, hd).transpose(2, 0, 3, 1, 4)
    q, k, v = qkv[0], qkv[1], qkv[2]                              # (B, H, N, hd)
    attn = jnp.einsum("bhnd,bhmd->bhnm", q, k) * scale
    attn = jax.nn.softmax(attn, axis=-1)
    out = jnp.einsum("bhnm,bhmd->bhnd", attn, v)                  # (B, H, N, hd)
    return out.transpose(0, 2, 1, 3).reshape(B, N, C)


if __name__ == "__main__":
    B, N, C = 2, 8, 32
    num_heads = 2

    key = jax.random.PRNGKey(0)
    kx, kw = jax.random.split(key)
    x = jax.random.normal(kx, (B, N, C), dtype=jnp.float32)
    # Deterministic init, nn.Linear-like scale (1/sqrt(fan_in)).
    w_qkv = jax.random.uniform(
        kw, (3 * C, C), dtype=jnp.float32, minval=-1.0, maxval=1.0
    ) * (1.0 / np.sqrt(C))

    # Weight packing happens once, off the forward path.
    w_packed = prepare_qkv_weight(w_qkv, num_heads=num_heads)

    out = attention_forward(x, w_packed, num_heads=num_heads)
    out = jax.block_until_ready(out)

    ref = attention_reference(x, w_qkv, num_heads=num_heads)
    # Tolerance loosened: bf16 MXU operands + approx EUP reciprocal vs f32 ref.
    np.testing.assert_allclose(np.asarray(out), np.asarray(ref), rtol=2e-2, atol=2e-2)

    print("KERNEL_OK")
</pallas_src>

<mosaic_0001>
module attributes {stable_mosaic.version = 11 : i64} {
  func.func @_attention_kernel(%arg0: i32, %arg1: memref<16x32xbf16, #tpu.memory_space<vmem>>, %arg2: memref<32x96xbf16, #tpu.memory_space<vmem>>, %arg3: memref<16x32xf32, #tpu.memory_space<vmem>>) attributes {dimension_semantics = [#tpu.dimension_semantics<parallel>], iteration_bounds = array<i64: 1>, scalar_prefetch = 0 : i64, scratch_operands = 0 : i64, tpu.core_type = #tpu.core_type<tc>, window_params = [{transform_indices = @transform_0, window_bounds = array<i64: 16, 32>}, {pipeline_mode = #tpu.pipeline_mode<synchronous>, transform_indices = @transform_1, window_bounds = array<i64: 32, 96>}, {transform_indices = @transform_2, window_bounds = array<i64: 16, 32>}]} {
    %c0 = arith.constant 0 : index
    %c0_0 = arith.constant 0 : index
    %0 = vector.load %arg1[%c0, %c0_0] : memref<16x32xbf16, #tpu.memory_space<vmem>>, vector<16x32xbf16>
    %c0_1 = arith.constant 0 : index
    %c0_2 = arith.constant 0 : index
    %1 = vector.load %arg2[%c0_1, %c0_2] : memref<32x96xbf16, #tpu.memory_space<vmem>>, vector<32x96xbf16>
    %cst = arith.constant dense<0.000000e+00> : vector<16x96xf32>
    %2 = tpu.matmul %0, %1, %cst {dimension_numbers = #tpu.dot_dimension_numbers<[1], [0], [0], [1], [0, 0, 1, 1], [], []>} : vector<16x32xbf16>, vector<32x96xbf16>, vector<16x96xf32> -> vector<16x96xf32>
    %3 = arith.truncf %2 : vector<16x96xf32> to vector<16x96xbf16>
    %4 = vector.extract_strided_slice %3 {offsets = [0, 0], sizes = [16, 32], strides = [1, 1]} : vector<16x96xbf16> to vector<16x32xbf16>
    %5 = vector.extract_strided_slice %3 {offsets = [0, 32], sizes = [16, 32], strides = [1, 1]} : vector<16x96xbf16> to vector<16x32xbf16>
    %6 = vector.extract_strided_slice %3 {offsets = [0, 64], sizes = [16, 32], strides = [1, 1]} : vector<16x96xbf16> to vector<16x32xbf16>
    %7 = vector.extract_strided_slice %4 {offsets = [0, 0], sizes = [8, 16], strides = [1, 1]} : vector<16x32xbf16> to vector<8x16xbf16>
    %8 = vector.extract_strided_slice %5 {offsets = [0, 0], sizes = [8, 16], strides = [1, 1]} : vector<16x32xbf16> to vector<8x16xbf16>
    %cst_3 = arith.constant dense<0.000000e+00> : vector<8x8xf32>
    %9 = tpu.matmul %7, %8, %cst_3 {dimension_numbers = #tpu.dot_dimension_numbers<[1], [1], [0], [0], [0, 0, 1, 0], [], []>} : vector<8x16xbf16>, vector<8x16xbf16>, vector<8x8xf32> -> vector<8x8xf32>
    %cst_4 = arith.constant dense<0xFF800000> : vector<8xf32>
    %10 = vector.multi_reduction <maximumf>, %9, %cst_4 [1] : vector<8x8xf32> to vector<8xf32>
    %11 = vector.shape_cast %10 : vector<8xf32> to vector<8x1xf32>
    %12 = vector.broadcast %11 : vector<8x1xf32> to vector<8x8xf32>
    %13 = arith.subf %9, %12 : vector<8x8xf32>
    %14 = math.exp %13 : vector<8x8xf32>
    %cst_5 = arith.constant dense<0.000000e+00> : vector<8xf32>
    %15 = vector.multi_reduction <add>, %14, %cst_5 [1] : vector<8x8xf32> to vector<8xf32>
    %16 = vector.shape_cast %15 : vector<8xf32> to vector<8x1xf32>
    %17 = tpu.reciprocal %16 {approx = true} : vector<8x1xf32> -> vector<8x1xf32>
    %18 = vector.broadcast %17 : vector<8x1xf32> to vector<8x8xf32>
    %19 = arith.mulf %14, %18 : vector<8x8xf32>
    %20 = arith.truncf %19 : vector<8x8xf32> to vector<8x8xbf16>
    %21 = vector.extract_strided_slice %6 {offsets = [0, 0], sizes = [8, 16], strides = [1, 1]} : vector<16x32xbf16> to vector<8x16xbf16>
    %cst_6 = arith.constant dense<0.000000e+00> : vector<8x16xf32>
    %22 = tpu.matmul %20, %21, %cst_6 {dimension_numbers = #tpu.dot_dimension_numbers<[1], [0], [0], [1], [0, 0, 1, 1], [], []>} : vector<8x8xbf16>, vector<8x16xbf16>, vector<8x16xf32> -> vector<8x16xf32>
    %23 = vector.extract_strided_slice %4 {offsets = [0, 16], sizes = [8, 16], strides = [1, 1]} : vector<16x32xbf16> to vector<8x16xbf16>
    %24 = vector.extract_strided_slice %5 {offsets = [0, 16], sizes = [8, 16], strides = [1, 1]} : vector<16x32xbf16> to vector<8x16xbf16>
    %cst_7 = arith.constant dense<0.000000e+00> : vector<8x8xf32>
    %25 = tpu.matmul %23, %24, %cst_7 {dimension_numbers = #tpu.dot_dimension_numbers<[1], [1], [0], [0], [0, 0, 1, 0], [], []>} : vector<8x16xbf16>, vector<8x16xbf16>, vector<8x8xf32> -> vector<8x8xf32>
    %cst_8 = arith.constant dense<0xFF800000> : vector<8xf32>
    %26 = vector.multi_reduction <maximumf>, %25, %cst_8 [1] : vector<8x8xf32> to vector<8xf32>
    %27 = vector.shape_cast %26 : vector<8xf32> to vector<8x1xf32>
    %28 = vector.broadcast %27 : vector<8x1xf32> to vector<8x8xf32>
    %29 = arith.subf %25, %28 : vector<8x8xf32>
    %30 = math.exp %29 : vector<8x8xf32>
    %cst_9 = arith.constant dense<0.000000e+00> : vector<8xf32>
    %31 = vector.multi_reduction <add>, %30, %cst_9 [1] : vector<8x8xf32> to vector<8xf32>
    %32 = vector.shape_cast %31 : vector<8xf32> to vector<8x1xf32>
    %33 = tpu.reciprocal %32 {approx = true} : vector<8x1xf32> -> vector<8x1xf32>
    %34 = vector.broadcast %33 : vector<8x1xf32> to vector<8x8xf32>
    %35 = arith.mulf %30, %34 : vector<8x8xf32>
    %36 = arith.truncf %35 : vector<8x8xf32> to vector<8x8xbf16>
    %37 = vector.extract_strided_slice %6 {offsets = [0, 16], sizes = [8, 16], strides = [1, 1]} : vector<16x32xbf16> to vector<8x16xbf16>
    %cst_10 = arith.constant dense<0.000000e+00> : vector<8x16xf32>
    %38 = tpu.matmul %36, %37, %cst_10 {dimension_numbers = #tpu.dot_dimension_numbers<[1], [0], [0], [1], [0, 0, 1, 1], [], []>} : vector<8x8xbf16>, vector<8x16xbf16>, vector<8x16xf32> -> vector<8x16xf32>
    %39 = tpu.concatenate %22, %38 in 1 : vector<8x16xf32>, vector<8x16xf32> -> vector<8x32xf32>
    %40 = vector.extract_strided_slice %4 {offsets = [8, 0], sizes = [8, 16], strides = [1, 1]} : vector<16x32xbf16> to vector<8x16xbf16>
    %41 = vector.extract_strided_slice %5 {offsets = [8, 0], sizes = [8, 16], strides = [1, 1]} : vector<16x32xbf16> to vector<8x16xbf16>
    %cst_11 = arith.constant dense<0.000000e+00> : vector<8x8xf32>
    %42 = tpu.matmul %40, %41, %cst_11 {dimension_numbers = #tpu.dot_dimension_numbers<[1], [1], [0], [0], [0, 0, 1, 0], [], []>} : vector<8x16xbf16>, vector<8x16xbf16>, vector<8x8xf32> -> vector<8x8xf32>
    %cst_12 = arith.constant dense<0xFF800000> : vector<8xf32>
    %43 = vector.multi_reduction <maximumf>, %42, %cst_12 [1] : vector<8x8xf32> to vector<8xf32>
    %44 = vector.shape_cast %43 : vector<8xf32> to vector<8x1xf32>
    %45 = vector.broadcast %44 : vector<8x1xf32> to vector<8x8xf32>
    %46 = arith.subf %42, %45 : vector<8x8xf32>
    %47 = math.exp %46 : vector<8x8xf32>
    %cst_13 = arith.constant dense<0.000000e+00> : vector<8xf32>
    %48 = vector.multi_reduction <add>, %47, %cst_13 [1] : vector<8x8xf32> to vector<8xf32>
    %49 = vector.shape_cast %48 : vector<8xf32> to vector<8x1xf32>
    %50 = tpu.reciprocal %49 {approx = true} : vector<8x1xf32> -> vector<8x1xf32>
    %51 = vector.broadcast %50 : vector<8x1xf32> to vector<8x8xf32>
    %52 = arith.mulf %47, %51 : vector<8x8xf32>
    %53 = arith.truncf %52 : vector<8x8xf32> to vector<8x8xbf16>
    %54 = vector.extract_strided_slice %6 {offsets = [8, 0], sizes = [8, 16], strides = [1, 1]} : vector<16x32xbf16> to vector<8x16xbf16>
    %cst_14 = arith.constant dense<0.000000e+00> : vector<8x16xf32>
    %55 = tpu.matmul %53, %54, %cst_14 {dimension_numbers = #tpu.dot_dimension_numbers<[1], [0], [0], [1], [0, 0, 1, 1], [], []>} : vector<8x8xbf16>, vector<8x16xbf16>, vector<8x16xf32> -> vector<8x16xf32>
    %56 = vector.extract_strided_slice %4 {offsets = [8, 16], sizes = [8, 16], strides = [1, 1]} : vector<16x32xbf16> to vector<8x16xbf16>
    %57 = vector.extract_strided_slice %5 {offsets = [8, 16], sizes = [8, 16], strides = [1, 1]} : vector<16x32xbf16> to vector<8x16xbf16>
    %cst_15 = arith.constant dense<0.000000e+00> : vector<8x8xf32>
    %58 = tpu.matmul %56, %57, %cst_15 {dimension_numbers = #tpu.dot_dimension_numbers<[1], [1], [0], [0], [0, 0, 1, 0], [], []>} : vector<8x16xbf16>, vector<8x16xbf16>, vector<8x8xf32> -> vector<8x8xf32>
    %cst_16 = arith.constant dense<0xFF800000> : vector<8xf32>
    %59 = vector.multi_reduction <maximumf>, %58, %cst_16 [1] : vector<8x8xf32> to vector<8xf32>
    %60 = vector.shape_cast %59 : vector<8xf32> to vector<8x1xf32>
    %61 = vector.broadcast %60 : vector<8x1xf32> to vector<8x8xf32>
    %62 = arith.subf %58, %61 : vector<8x8xf32>
    %63 = math.exp %62 : vector<8x8xf32>
    %cst_17 = arith.constant dense<0.000000e+00> : vector<8xf32>
    %64 = vector.multi_reduction <add>, %63, %cst_17 [1] : vector<8x8xf32> to vector<8xf32>
    %65 = vector.shape_cast %64 : vector<8xf32> to vector<8x1xf32>
    %66 = tpu.reciprocal %65 {approx = true} : vector<8x1xf32> -> vector<8x1xf32>
    %67 = vector.broadcast %66 : vector<8x1xf32> to vector<8x8xf32>
    %68 = arith.mulf %63, %67 : vector<8x8xf32>
    %69 = arith.truncf %68 : vector<8x8xf32> to vector<8x8xbf16>
    %70 = vector.extract_strided_slice %6 {offsets = [8, 16], sizes = [8, 16], strides = [1, 1]} : vector<16x32xbf16> to vector<8x16xbf16>
    %cst_18 = arith.constant dense<0.000000e+00> : vector<8x16xf32>
    %71 = tpu.matmul %69, %70, %cst_18 {dimension_numbers = #tpu.dot_dimension_numbers<[1], [0], [0], [1], [0, 0, 1, 1], [], []>} : vector<8x8xbf16>, vector<8x16xbf16>, vector<8x16xf32> -> vector<8x16xf32>
    %72 = tpu.concatenate %55, %71 in 1 : vector<8x16xf32>, vector<8x16xf32> -> vector<8x32xf32>
    %73 = tpu.concatenate %39, %72 in 0 : vector<8x32xf32>, vector<8x32xf32> -> vector<16x32xf32>
    %c0_19 = arith.constant 0 : index
    %c0_20 = arith.constant 0 : index
    %74 = vector.load %arg3[%c0_19, %c0_20] : memref<16x32xf32, #tpu.memory_space<vmem>>, vector<16x32xf32>
    tpu.vector_store %arg3[%c0_19, %c0_20], %73 {strides = array<i32>} : memref<16x32xf32, #tpu.memory_space<vmem>>, vector<16x32xf32>,
    return
  }
  func.func @transform_0(%arg0: i32) -> (i32, i32) {
    %c0_i32 = arith.constant 0 : i32
    %c0_i32_0 = arith.constant 0 : i32
    return %arg0, %c0_i32 : i32, i32
  }
  func.func @transform_1(%arg0: i32) -> (i32, i32) {
    %c0_i32 = arith.constant 0 : i32
    %c0_i32_0 = arith.constant 0 : i32
    %c0_i32_1 = arith.constant 0 : i32
    return %c0_i32, %c0_i32_0 : i32, i32
  }
  func.func @transform_2(%arg0: i32) -> (i32, i32) {
    %c0_i32 = arith.constant 0 : i32
    %c0_i32_0 = arith.constant 0 : i32
    return %arg0, %c0_i32 : i32, i32
  }
}

</mosaic_0001>

<llo_original>
// kernel: tpu_custom_call.1
$region0: #{tpu_custom_call.1}
  #allocation0 [shape = 'u32[]', space=smem, size = 0x4, offset = 0x4, fixed_abs, tag = 'smem constant byte address 0x4 - core index']
  #allocation1 [shape = 'u32[144,128]{1,0:T(1,128)}', space=vmem, size = 0x12000, scoped, tag = 'internal scratch']
  %s0 = inlined_call_operand.hbm [shape: bf16[16,32], index: 0, kind: input, shape index: {}]
  %s1 = inlined_call_operand.hbm [shape: bf16[32,96], index: 1, kind: input, shape index: {}]
  %s2 = inlined_call_operand.hbm [shape: f32[16,32], index: 2, kind: output, shape index: {}]
  %s3 = sld [smem:[#allocation0]]
  $region26: #{tpu_custom_call.1} parent=0
    _
  %s5 = ssub.s32 1, %s3
  %s6 = scalar_select 0, %s5, %s3
  $region1: #{tpu_custom_call.1} parent=0
    #allocation2 [shape = 'u8[4096]{0}', space=vmem, size = 0x1000, scoped, tag = 'input window, operand 0, single buffered']
    #allocation3 [shape = 's32[1]{0}', space=sflag, size = 0x4, scoped, tag = 'scoped memory for tpu_custom_call.1']
    #allocation4 [shape = 's32[1]{0}', space=sflag, size = 0x4, scoped, tag = 'scoped memory for tpu_custom_call.1']
    #allocation5 [shape = 'u8[8192]{0}', space=vmem, size = 0x2000, scoped, tag = 'input window, operand 1, single buffered']
    #allocation6 [shape = 's32[1]{0}', space=sflag, size = 0x4, scoped, tag = 'scoped memory for tpu_custom_call.1']
    #allocation7 [shape = 'u8[8192]{0}', space=vmem, size = 0x2000, scoped, tag = 'output window, operand 0, single buffered']
    %7 = vsyncpa [#allocation3], 0
    %8 = vsyncpa [#allocation6], 0
    %9 = vsyncpa [#allocation4], 0
    // Predicated region
    $region2: #{tpu_custom_call.1} parent=1 // pred_check
      _
    $region3: #{tpu_custom_call.1} parent=1 // pred_check_branch
      %11 = sbr.rel (0) target = $region5
    $region4: #{tpu_custom_call.1} parent=1 // pred_region
      %s13 = ssub.s32 128, 128
      %14 = vsyncadd [#allocation3], %s13
      %s15 = sshll.u32 [#allocation2], 4
      %s16 = int_to_ptr.vmem [resolvable:$true] %s15
      %21 = dma.hbm_to_vmem [thread:$0]  %s0, 128, %s16, [#allocation3], 64, 64, 4
    $region5: #{tpu_custom_call.1} parent=1 // pred_fallthru
      _
    // Predicated region
    $region6: #{tpu_custom_call.1} parent=1 // pred_check
      _
    $region7: #{tpu_custom_call.1} parent=1 // pred_check_branch
      %23 = sbr.rel (0) target = $region9
    $region8: #{tpu_custom_call.1} parent=1 // pred_region
      %s25 = ssub.s32 256, 256
      %26 = vsyncadd [#allocation6], %s25
      %s27 = sshll.u32 [#allocation5], 4
      %s28 = int_to_ptr.vmem [resolvable:$true] %s27
      %33 = dma.hbm_to_vmem [thread:$0]  %s1, 256, %s28, [#allocation6], 64, 64, 4
    $region9: #{tpu_custom_call.1} parent=1 // pred_fallthru
      _
    // Predicated region
    $region10: #{tpu_custom_call.1} parent=1 // pred_check
      _
    $region11: #{tpu_custom_call.1} parent=1 // pred_check_branch
      %35 = sbr.rel (0) target = $region13
    $region12: #{tpu_custom_call.1} parent=1 // pred_region
      %36 = dma.done [#allocation3], 128
    $region13: #{tpu_custom_call.1} parent=1 // pred_fallthru
      _
    // Predicated region
    $region14: #{tpu_custom_call.1} parent=1 // pred_check
      _
    $region15: #{tpu_custom_call.1} parent=1 // pred_check_branch
      %38 = sbr.rel (0) target = $region17
    $region16: #{tpu_custom_call.1} parent=1 // pred_region
      %39 = dma.done [#allocation6], 256
    $region17: #{tpu_custom_call.1} parent=1 // pred_fallthru
      _
    %v41 = vld [vmem:[#allocation2] sm:$0xf]
    %v42 = vld [vmem:[#allocation2 + $0x4] sm:$0xf]
    %v43 = vld [vmem:[#allocation5] sm:$0xf]
    %v44 = vld [vmem:[#allocation5 + $0x4] sm:$0xf]
    %v45 = vld [vmem:[#allocation5 + $0x8] sm:$0xf]
    %v46 = vld [vmem:[#allocation5 + $0xc] sm:$0xf]
    %v49 = vunpack.c.l.b16 %v41
    %v50 = vunpack.c.l.b16 %v42
    %v51 = vpack.c.b16 %v50, %v49
    %v56 = vunpack.c.l.b16 %v43
    %v57 = vunpack.c.l.b16 %v44
    %v58 = vunpack.c.l.b16 %v45
    %v59 = vunpack.c.l.b16 %v46
    %v60 = vpack.c.b16 %v57, %v56
    %v61 = vpack.c.b16 %v59, %v58
    %vm64 = vcmask 261120
    %v66 = vsel %vm64, %v51, 0
    %68 = vmatprep.subr.bf16.mxu0 0
    %69 = vmatpush1.bf16.msra.mxu0 %v60
    %70 = vmatprep.subr.bf16.mxu0 0
    %71 = vmatpush1.bf16.msra.mxu0 %v61
    %72 = vmatprep.subr.bf16.mxu0 0
    %73 = vmatpush1.bf16.msra.mxu0 0
    %74 = vmatprep.subr.bf16.mxu0 0
    %75 = vmatpush1.bf16.msra.mxu0 0
    %76 = vmatprep.subr.bf16.mxu0 0
    %77 = vmatpush1.bf16.msra.mxu0 0
    %78 = vmatprep.subr.bf16.mxu0 0
    %79 = vmatpush1.bf16.msra.mxu0 0
    %80 = vmatprep.subr.bf16.mxu0 0
    %81 = vmatpush1.bf16.msra.mxu0 0
    %82 = vmatprep.subr.bf16.mxu0 0
    %83 = vmatpush1.bf16.msra.mxu0 0
    %84 = vmatprep.subr.bf16.mxu0 0
    %85 = vmatpush1.bf16.msra.mxu0 0
    %86 = vmatprep.subr.bf16.mxu0 0
    %87 = vmatpush1.bf16.msra.mxu0 0
    %88 = vmatprep.subr.bf16.mxu0 0
    %89 = vmatpush1.bf16.msra.mxu0 0
    %90 = vmatprep.subr.bf16.mxu0 0
    %91 = vmatpush1.bf16.msra.mxu0 0
    %92 = vmatprep.subr.bf16.mxu0 0
    %93 = vmatpush1.bf16.msra.mxu0 0
    %94 = vmatprep.subr.bf16.mxu0 0
    %95 = vmatpush1.bf16.msra.mxu0 0
    %96 = vmatprep.subr.bf16.mxu0 0
    %97 = vmatpush1.bf16.msra.mxu0 0
    %98 = vmatprep.subr.bf16.mxu0 0
    %99 = vmatpush1.bf16.msra.mxu0 0
    %100 = vmatprep.mubr.bf16.mxu0 0
    %101 = vmatmul.mubr.bf16.gmra.mrb[0].mxu0 %v66
    %v102 = vpop.f32.mrb[0].mxu0
    %v103 = vadd.f32 0.0, %v102
    %v104 = vpop.f32.mrb[0].mxu0
    %v105 = vpop.f32.mrb[0].mxu0
    %v106 = vadd.f32 0.0, %v105
    %v107 = vpop.f32.mrb[0].mxu0
    %108 = vdwg.mxu0
    %v109 = vpack.c.bf16 %v106, %v103
    %111 = vrot.lane.b32.xlu0 %v109, 96
    %v112 = vpop.permute.xlu0 %111
    %vm113 = vcmask 130048
    %v115 = vsel %vm113, %v109, 0
    %v118 = vsel %vm113, %v112, 0
    %120 = vmatprep.subr.bf16.mxu0 0
    %121 = vmatpush1.bf16.xpose.msra.mxu0 %v118
    %122 = vmatprep.subr.bf16.mxu0 0
    %123 = vmatpush1.bf16.xpose.msra.mxu0 0
    %124 = vmatprep.subr.bf16.mxu0 0
    %125 = vmatpush1.bf16.xpose.msra.mxu0 0
    %126 = vmatprep.subr.bf16.mxu0 0
    %127 = vmatpush1.bf16.xpose.msra.mxu0 0
    %128 = vmatprep.subr.bf16.mxu0 0
    %129 = vmatpush1.bf16.xpose.msra.mxu0 0
    %130 = vmatprep.subr.bf16.mxu0 0
    %131 = vmatpush1.bf16.xpose.msra.mxu0 0
    %132 = vmatprep.subr.bf16.mxu0 0
    %133 = vmatpush1.bf16.xpose.msra.mxu0 0
    %134 = vmatprep.subr.bf16.mxu0 0
    %135 = vmatpush1.bf16.xpose.msra.mxu0 0
    %136 = vmatprep.subr.bf16.mxu0 0
    %137 = vmatpush1.bf16.xpose.msra.mxu0 0
    %138 = vmatprep.subr.bf16.mxu0 0
    %139 = vmatpush1.bf16.xpose.msra.mxu0 0
    %140 = vmatprep.subr.bf16.mxu0 0
    %141 = vmatpush1.bf16.xpose.msra.mxu0 0
    %142 = vmatprep.subr.bf16.mxu0 0
    %143 = vmatpush1.bf16.xpose.msra.mxu0 0
    %144 = vmatprep.subr.bf16.mxu0 0
    %145 = vmatpush1.bf16.xpose.msra.mxu0 0
    %146 = vmatprep.subr.bf16.mxu0 0
    %147 = vmatpush1.bf16.xpose.msra.mxu0 0
    %148 = vmatprep.subr.bf16.mxu0 0
    %149 = vmatpush1.bf16.xpose.msra.mxu0 0
    %150 = vmatprep.subr.bf16.mxu0 0
    %151 = vmatpush1.bf16.xpose.msra.mxu0 0
    %152 = vmatprep.mubr.bf16.mxu0 0
    %153 = vmatmul.mubr.bf16.gmra.mrb[0].mxu0 %v115
    %v154 = vpop.f32.mrb[0].mxu0
    %v155 = vadd.f32 0.0, %v154
    %v156 = vpop.f32.mrb[0].mxu0
    %v157 = vpop.f32.mrb[0].mxu0
    %v158 = vpop.f32.mrb[0].mxu0
    %159 = vdwg.mxu0
    %vm160 = vcmask 64512
    %v161 = vsel %vm160, %v155, -inf
    %162 = vmax.xlane.f32.xlu0 %v161
    %v163 = vpop.xlane.xlu0 %162
    %v164 = vsub.f32 %v155, %v163
    %v165 = vmul.f32 %v164, 1.442695
    %v166 = vpow.pop %v165
    %v167 = vsel %vm160, %v166, 0.0
    %168 = vadd.xlane.f32.xlu0 %v167
    %v169 = vpop.xlane.xlu0 %168
    %v170 = vrcp.pop %v169
    %v171 = vmul.f32 %v166, %v170
    %v172 = vpack.c.bf16 %v171, %v171
    %173 = vrot.lane.b32.xlu0 %v109, 64
    %v174 = vpop.permute.xlu0 %173
    %v176 = vsel %vm160, %v172, 0
    %vm178 = vcmask 1043456
    %v180 = vsel %vm178, %v174, 0
    %182 = vmatprep.subr.bf16.mxu0 0
    %183 = vmatpush1.bf16.msra.mxu0 %v180
    %184 = vmatprep.subr.bf16.mxu0 0
    %185 = vmatpush1.bf16.msra.mxu0 0
    %186 = vmatprep.subr.bf16.mxu0 0
    %187 = vmatpush1.bf16.msra.mxu0 0
    %188 = vmatprep.subr.bf16.mxu0 0
    %189 = vmatpush1.bf16.msra.mxu0 0
    %190 = vmatprep.subr.bf16.mxu0 0
    %191 = vmatpush1.bf16.msra.mxu0 0
    %192 = vmatprep.subr.bf16.mxu0 0
    %193 = vmatpush1.bf16.msra.mxu0 0
    %194 = vmatprep.subr.bf16.mxu0 0
    %195 = vmatpush1.bf16.msra.mxu0 0
    %196 = vmatprep.subr.bf16.mxu0 0
    %197 = vmatpush1.bf16.msra.mxu0 0
    %198 = vmatprep.subr.bf16.mxu0 0
    %199 = vmatpush1.bf16.msra.mxu0 0
    %200 = vmatprep.subr.bf16.mxu0 0
    %201 = vmatpush1.bf16.msra.mxu0 0
    %202 = vmatprep.subr.bf16.mxu0 0
    %203 = vmatpush1.bf16.msra.mxu0 0
    %204 = vmatprep.subr.bf16.mxu0 0
    %205 = vmatpush1.bf16.msra.mxu0 0
    %206 = vmatprep.subr.bf16.mxu0 0
    %207 = vmatpush1.bf16.msra.mxu0 0
    %208 = vmatprep.subr.bf16.mxu0 0
    %209 = vmatpush1.bf16.msra.mxu0 0
    %210 = vmatprep.subr.bf16.mxu0 0
    %211 = vmatpush1.bf16.msra.mxu0 0
    %212 = vmatprep.subr.bf16.mxu0 0
    %213 = vmatpush1.bf16.msra.mxu0 0
    %214 = vmatprep.mubr.bf16.mxu0 0
    %215 = vmatmul.mubr.bf16.gmra.mrb[0].mxu0 %v176
    %v216 = vpop.f32.mrb[0].mxu0
    %v217 = vadd.f32 0.0, %v216
    %v218 = vpop.f32.mrb[0].mxu0
    %v219 = vpop.f32.mrb[0].mxu0
    %v220 = vpop.f32.mrb[0].mxu0
    %221 = vdwg.mxu0
    %222 = vrot.lane.b32.xlu0 %v109, 112
    %v223 = vpop.permute.xlu0 %222
    %224 = vrot.lane.b32.xlu0 %v109, 80
    %v225 = vpop.permute.xlu0 %224
    %v227 = vsel %vm113, %v223, 0
    %v230 = vsel %vm113, %v225, 0
    %232 = vmatprep.subr.bf16.mxu0 0
    %233 = vmatpush1.bf16.xpose.msra.mxu0 %v230
    %234 = vmatprep.subr.bf16.mxu0 0
    %235 = vmatpush1.bf16.xpose.msra.mxu0 0
    %236 = vmatprep.subr.bf16.mxu0 0
    %237 = vmatpush1.bf16.xpose.msra.mxu0 0
    %238 = vmatprep.subr.bf16.mxu0 0
    %239 = vmatpush1.bf16.xpose.msra.mxu0 0
    %240 = vmatprep.subr.bf16.mxu0 0
    %241 = vmatpush1.bf16.xpose.msra.mxu0 0
    %242 = vmatprep.subr.bf16.mxu0 0
    %243 = vmatpush1.bf16.xpose.msra.mxu0 0
    %244 = vmatprep.subr.bf16.mxu0 0
    %245 = vmatpush1.bf16.xpose.msra.mxu0 0
    %246 = vmatprep.subr.bf16.mxu0 0
    %247 = vmatpush1.bf16.xpose.msra.mxu0 0
    %248 = vmatprep.subr.bf16.mxu0 0
    %249 = vmatpush1.bf16.xpose.msra.mxu0 0
    %250 = vmatprep.subr.bf16.mxu0 0
    %251 = vmatpush1.bf16.xpose.msra.mxu0 0
    %252 = vmatprep.subr.bf16.mxu0 0
    %253 = vmatpush1.bf16.xpose.msra.mxu0 0
    %254 = vmatprep.subr.bf16.mxu0 0
    %255 = vmatpush1.bf16.xpose.msra.mxu0 0
    %256 = vmatprep.subr.bf16.mxu0 0
    %257 = vmatpush1.bf16.xpose.msra.mxu0 0
    %258 = vmatprep.subr.bf16.mxu0 0
    %259 = vmatpush1.bf16.xpose.msra.mxu0 0
    %260 = vmatprep.subr.bf16.mxu0 0
    %261 = vmatpush1.bf16.xpose.msra.mxu0 0
    %262 = vmatprep.subr.bf16.mxu0 0
    %263 = vmatpush1.bf16.xpose.msra.mxu0 0
    %264 = vmatprep.mubr.bf16.mxu0 0
    %265 = vmatmul.mubr.bf16.gmra.mrb[0].mxu0 %v227
    %v266 = vpop.f32.mrb[0].mxu0
    %v267 = vadd.f32 0.0, %v266
    %v268 = vpop.f32.mrb[0].mxu0
    %v269 = vpop.f32.mrb[0].mxu0
    %v270 = vpop.f32.mrb[0].mxu0
    %271 = vdwg.mxu0
    %v272 = vsel %vm160, %v267, -inf
    %273 = vmax.xlane.f32.xlu0 %v272
    %v274 = vpop.xlane.xlu0 %273
    %v275 = vsub.f32 %v267, %v274
    %v276 = vmul.f32 %v275, 1.442695
    %v277 = vpow.pop %v276
    %v278 = vsel %vm160, %v277, 0.0
    %279 = vadd.xlane.f32.xlu0 %v278
    %v280 = vpop.xlane.xlu0 %279
    %v281 = vrcp.pop %v280
    %v282 = vmul.f32 %v277, %v281
    %v283 = vpack.c.bf16 %v282, %v282
    %284 = vrot.lane.b32.xlu0 %v109, 48
    %v285 = vpop.permute.xlu0 %284
    %v287 = vsel %vm160, %v283, 0
    %v290 = vsel %vm178, %v285, 0
    %292 = vmatprep.subr.bf16.mxu0 0
    %293 = vmatpush1.bf16.msra.mxu0 %v290
    %294 = vmatprep.subr.bf16.mxu0 0
    %295 = vmatpush1.bf16.msra.mxu0 0
    %296 = vmatprep.subr.bf16.mxu0 0
    %297 = vmatpush1.bf16.msra.mxu0 0
    %298 = vmatprep.subr.bf16.mxu0 0
    %299 = vmatpush1.bf16.msra.mxu0 0
    %300 = vmatprep.subr.bf16.mxu0 0
    %301 = vmatpush1.bf16.msra.mxu0 0
    %302 = vmatprep.subr.bf16.mxu0 0
    %303 = vmatpush1.bf16.msra.mxu0 0
    %304 = vmatprep.subr.bf16.mxu0 0
    %305 = vmatpush1.bf16.msra.mxu0 0
    %306 = vmatprep.subr.bf16.mxu0 0
    %307 = vmatpush1.bf16.msra.mxu0 0
    %308 = vmatprep.subr.bf16.mxu0 0
    %309 = vmatpush1.bf16.msra.mxu0 0
    %310 = vmatprep.subr.bf16.mxu0 0
    %311 = vmatpush1.bf16.msra.mxu0 0
    %312 = vmatprep.subr.bf16.mxu0 0
    %313 = vmatpush1.bf16.msra.mxu0 0
    %314 = vmatprep.subr.bf16.mxu0 0
    %315 = vmatpush1.bf16.msra.mxu0 0
    %316 = vmatprep.subr.bf16.mxu0 0
    %317 = vmatpush1.bf16.msra.mxu0 0
    %318 = vmatprep.subr.bf16.mxu0 0
    %319 = vmatpush1.bf16.msra.mxu0 0
    %320 = vmatprep.subr.bf16.mxu0 0
    %321 = vmatpush1.bf16.msra.mxu0 0
    %322 = vmatprep.subr.bf16.mxu0 0
    %323 = vmatpush1.bf16.msra.mxu0 0
    %324 = vmatprep.mubr.bf16.mxu0 0
    %325 = vmatmul.mubr.bf16.gmra.mrb[0].mxu0 %v287
    %v326 = vpop.f32.mrb[0].mxu0
    %v327 = vadd.f32 0.0, %v326
    %v328 = vpop.f32.mrb[0].mxu0
    %v329 = vpop.f32.mrb[0].mxu0
    %v330 = vpop.f32.mrb[0].mxu0
    %331 = vdwg.mxu0
    %333 = vrot.lane.b32.xlu0 %v327, 16
    %v334 = vpop.permute.xlu0 %333
    %v336 = vsel %vm113, %v217, %v334
    %v337 = vrot.slane %v109, 4
    %338 = vrot.lane.b32.xlu0 %v337, 96
    %v339 = vpop.permute.xlu0 %338
    %v341 = vsel %vm113, %v337, 0
    %v344 = vsel %vm113, %v339, 0
    %346 = vmatprep.subr.bf16.mxu0 0
    %347 = vmatpush1.bf16.xpose.msra.mxu0 %v344
    %348 = vmatprep.subr.bf16.mxu0 0
    %349 = vmatpush1.bf16.xpose.msra.mxu0 0
    %350 = vmatprep.subr.bf16.mxu0 0
    %351 = vmatpush1.bf16.xpose.msra.mxu0 0
    %352 = vmatprep.subr.bf16.mxu0 0
    %353 = vmatpush1.bf16.xpose.msra.mxu0 0
    %354 = vmatprep.subr.bf16.mxu0 0
    %355 = vmatpush1.bf16.xpose.msra.mxu0 0
    %356 = vmatprep.subr.bf16.mxu0 0
    %357 = vmatpush1.bf16.xpose.msra.mxu0 0
    %358 = vmatprep.subr.bf16.mxu0 0
    %359 = vmatpush1.bf16.xpose.msra.mxu0 0
    %360 = vmatprep.subr.bf16.mxu0 0
    %361 = vmatpush1.bf16.xpose.msra.mxu0 0
    %362 = vmatprep.subr.bf16.mxu0 0
    %363 = vmatpush1.bf16.xpose.msra.mxu0 0
    %364 = vmatprep.subr.bf16.mxu0 0
    %365 = vmatpush1.bf16.xpose.msra.mxu0 0
    %366 = vmatprep.subr.bf16.mxu0 0
    %367 = vmatpush1.bf16.xpose.msra.mxu0 0
    %368 = vmatprep.subr.bf16.mxu0 0
    %369 = vmatpush1.bf16.xpose.msra.mxu0 0
    %370 = vmatprep.subr.bf16.mxu0 0
    %371 = vmatpush1.bf16.xpose.msra.mxu0 0
    %372 = vmatprep.subr.bf16.mxu0 0
    %373 = vmatpush1.bf16.xpose.msra.mxu0 0
    %374 = vmatprep.subr.bf16.mxu0 0
    %375 = vmatpush1.bf16.xpose.msra.mxu0 0
    %376 = vmatprep.subr.bf16.mxu0 0
    %377 = vmatpush1.bf16.xpose.msra.mxu0 0
    %378 = vmatprep.mubr.bf16.mxu0 0
    %379 = vmatmul.mubr.bf16.gmra.mrb[0].mxu0 %v341
    %v380 = vpop.f32.mrb[0].mxu0
    %v381 = vadd.f32 0.0, %v380
    %v382 = vpop.f32.mrb[0].mxu0
    %v383 = vpop.f32.mrb[0].mxu0
    %v384 = vpop.f32.mrb[0].mxu0
    %385 = vdwg.mxu0
    %v386 = vsel %vm160, %v381, -inf
    %387 = vmax.xlane.f32.xlu0 %v386
    %v388 = vpop.xlane.xlu0 %387
    %v389 = vsub.f32 %v381, %v388
    %v390 = vmul.f32 %v389, 1.442695
    %v391 = vpow.pop %v390
    %v392 = vsel %vm160, %v391, 0.0
    %393 = vadd.xlane.f32.xlu0 %v392
    %v394 = vpop.xlane.xlu0 %393
    %v395 = vrcp.pop %v394
    %v396 = vmul.f32 %v391, %v395
    %v397 = vpack.c.bf16 %v396, %v396
    %398 = vrot.lane.b32.xlu0 %v337, 64
    %v399 = vpop.permute.xlu0 %398
    %v401 = vsel %vm160, %v397, 0
    %v404 = vsel %vm178, %v399, 0
    %406 = vmatprep.subr.bf16.mxu0 0
    %407 = vmatpush1.bf16.msra.mxu0 %v404
    %408 = vmatprep.subr.bf16.mxu0 0
    %409 = vmatpush1.bf16.msra.mxu0 0
    %410 = vmatprep.subr.bf16.mxu0 0
    %411 = vmatpush1.bf16.msra.mxu0 0
    %412 = vmatprep.subr.bf16.mxu0 0
    %413 = vmatpush1.bf16.msra.mxu0 0
    %414 = vmatprep.subr.bf16.mxu0 0
    %415 = vmatpush1.bf16.msra.mxu0 0
    %416 = vmatprep.subr.bf16.mxu0 0
    %417 = vmatpush1.bf16.msra.mxu0 0
    %418 = vmatprep.subr.bf16.mxu0 0
    %419 = vmatpush1.bf16.msra.mxu0 0
    %420 = vmatprep.subr.bf16.mxu0 0
    %421 = vmatpush1.bf16.msra.mxu0 0
    %422 = vmatprep.subr.bf16.mxu0 0
    %423 = vmatpush1.bf16.msra.mxu0 0
    %424 = vmatprep.subr.bf16.mxu0 0
    %425 = vmatpush1.bf16.msra.mxu0 0
    %426 = vmatprep.subr.bf16.mxu0 0
    %427 = vmatpush1.bf16.msra.mxu0 0
    %428 = vmatprep.subr.bf16.mxu0 0
    %429 = vmatpush1.bf16.msra.mxu0 0
    %430 = vmatprep.subr.bf16.mxu0 0
    %431 = vmatpush1.bf16.msra.mxu0 0
    %432 = vmatprep.subr.bf16.mxu0 0
    %433 = vmatpush1.bf16.msra.mxu0 0
    %434 = vmatprep.subr.bf16.mxu0 0
    %435 = vmatpush1.bf16.msra.mxu0 0
    %436 = vmatprep.subr.bf16.mxu0 0
    %437 = vmatpush1.bf16.msra.mxu0 0
    %438 = vmatprep.mubr.bf16.mxu0 0
    %439 = vmatmul.mubr.bf16.gmra.mrb[0].mxu0 %v401
    %v440 = vpop.f32.mrb[0].mxu0
    %v441 = vadd.f32 0.0, %v440
    %v442 = vpop.f32.mrb[0].mxu0
    %v443 = vpop.f32.mrb[0].mxu0
    %v444 = vpop.f32.mrb[0].mxu0
    %445 = vdwg.mxu0
    %446 = vrot.lane.b32.xlu0 %v337, 112
    %v447 = vpop.permute.xlu0 %446
    %448 = vrot.lane.b32.xlu0 %v337, 80
    %v449 = vpop.permute.xlu0 %448
    %v451 = vsel %vm113, %v447, 0
    %v454 = vsel %vm113, %v449, 0
    %456 = vmatprep.subr.bf16.mxu0 0
    %457 = vmatpush1.bf16.xpose.msra.mxu0 %v454
    %458 = vmatprep.subr.bf16.mxu0 0
    %459 = vmatpush1.bf16.xpose.msra.mxu0 0
    %460 = vmatprep.subr.bf16.mxu0 0
    %461 = vmatpush1.bf16.xpose.msra.mxu0 0
    %462 = vmatprep.subr.bf16.mxu0 0
    %463 = vmatpush1.bf16.xpose.msra.mxu0 0
    %464 = vmatprep.subr.bf16.mxu0 0
    %465 = vmatpush1.bf16.xpose.msra.mxu0 0
    %466 = vmatprep.subr.bf16.mxu0 0
    %467 = vmatpush1.bf16.xpose.msra.mxu0 0
    %468 = vmatprep.subr.bf16.mxu0 0
    %469 = vmatpush1.bf16.xpose.msra.mxu0 0
    %470 = vmatprep.subr.bf16.mxu0 0
    %471 = vmatpush1.bf16.xpose.msra.mxu0 0
    %472 = vmatprep.subr.bf16.mxu0 0
    %473 = vmatpush1.bf16.xpose.msra.mxu0 0
    %474 = vmatprep.subr.bf16.mxu0 0
    %475 = vmatpush1.bf16.xpose.msra.mxu0 0
    %476 = vmatprep.subr.bf16.mxu0 0
    %477 = vmatpush1.bf16.xpose.msra.mxu0 0
    %478 = vmatprep.subr.bf16.mxu0 0
    %479 = vmatpush1.bf16.xpose.msra.mxu0 0
    %480 = vmatprep.subr.bf16.mxu0 0
    %481 = vmatpush1.bf16.xpose.msra.mxu0 0
    %482 = vmatprep.subr.bf16.mxu0 0
    %483 = vmatpush1.bf16.xpose.msra.mxu0 0
    %484 = vmatprep.subr.bf16.mxu0 0
    %485 = vmatpush1.bf16.xpose.msra.mxu0 0
    %486 = vmatprep.subr.bf16.mxu0 0
    %487 = vmatpush1.bf16.xpose.msra.mxu0 0
    %488 = vmatprep.mubr.bf16.mxu0 0
    %489 = vmatmul.mubr.bf16.gmra.mrb[0].mxu0 %v451
    %v490 = vpop.f32.mrb[0].mxu0
    %v491 = vadd.f32 0.0, %v490
    %v492 = vpop.f32.mrb[0].mxu0
    %v493 = vpop.f32.mrb[0].mxu0
    %v494 = vpop.f32.mrb[0].mxu0
    %495 = vdwg.mxu0
    %v496 = vsel %vm160, %v491, -inf
    %497 = vmax.xlane.f32.xlu0 %v496
    %v498 = vpop.xlane.xlu0 %497
    %v499 = vsub.f32 %v491, %v498
    %v500 = vmul.f32 %v499, 1.442695
    %v501 = vpow.pop %v500
    %v502 = vsel %vm160, %v501, 0.0
    %503 = vadd.xlane.f32.xlu0 %v502
    %v504 = vpop.xlane.xlu0 %503
    %v505 = vrcp.pop %v504
    %v506 = vmul.f32 %v501, %v505
    %v507 = vpack.c.bf16 %v506, %v506
    %508 = vrot.lane.b32.xlu0 %v337, 48
    %v509 = vpop.permute.xlu0 %508
    %v511 = vsel %vm160, %v507, 0
    %v514 = vsel %vm178, %v509, 0
    %516 = vmatprep.subr.bf16.mxu0 0
    %517 = vmatpush1.bf16.msra.mxu0 %v514
    %518 = vmatprep.subr.bf16.mxu0 0
    %519 = vmatpush1.bf16.msra.mxu0 0
    %520 = vmatprep.subr.bf16.mxu0 0
    %521 = vmatpush1.bf16.msra.mxu0 0
    %522 = vmatprep.subr.bf16.mxu0 0
    %523 = vmatpush1.bf16.msra.mxu0 0
    %524 = vmatprep.subr.bf16.mxu0 0
    %525 = vmatpush1.bf16.msra.mxu0 0
    %526 = vmatprep.subr.bf16.mxu0 0
    %527 = vmatpush1.bf16.msra.mxu0 0
    %528 = vmatprep.subr.bf16.mxu0 0
    %529 = vmatpush1.bf16.msra.mxu0 0
    %530 = vmatprep.subr.bf16.mxu0 0
    %531 = vmatpush1.bf16.msra.mxu0 0
    %532 = vmatprep.subr.bf16.mxu0 0
    %533 = vmatpush1.bf16.msra.mxu0 0
    %534 = vmatprep.subr.bf16.mxu0 0
    %535 = vmatpush1.bf16.msra.mxu0 0
    %536 = vmatprep.subr.bf16.mxu0 0
    %537 = vmatpush1.bf16.msra.mxu0 0
    %538 = vmatprep.subr.bf16.mxu0 0
    %539 = vmatpush1.bf16.msra.mxu0 0
    %540 = vmatprep.subr.bf16.mxu0 0
    %541 = vmatpush1.bf16.msra.mxu0 0
    %542 = vmatprep.subr.bf16.mxu0 0
    %543 = vmatpush1.bf16.msra.mxu0 0
    %544 = vmatprep.subr.bf16.mxu0 0
    %545 = vmatpush1.bf16.msra.mxu0 0
    %546 = vmatprep.subr.bf16.mxu0 0
    %547 = vmatpush1.bf16.msra.mxu0 0
    %548 = vmatprep.mubr.bf16.mxu0 0
    %549 = vmatmul.mubr.bf16.gmra.mrb[0].mxu0 %v511
    %v550 = vpop.f32.mrb[0].mxu0
    %v551 = vadd.f32 0.0, %v550
    %v552 = vpop.f32.mrb[0].mxu0
    %v553 = vpop.f32.mrb[0].mxu0
    %v554 = vpop.f32.mrb[0].mxu0
    %555 = vdwg.mxu0
    %557 = vrot.lane.b32.xlu0 %v551, 16
    %v558 = vpop.permute.xlu0 %557
    %v560 = vsel %vm113, %v441, %v558
    %561 = vst.msk [vmem:[#allocation7] sm:$0xff] %vm64, %v336
    %562 = vst.msk [vmem:[#allocation7 + $0x8] sm:$0xff] %vm64, %v560
    // Predicated region
    $region18: #{tpu_custom_call.1} parent=1 // pred_check
      _
    $region19: #{tpu_custom_call.1} parent=1 // pred_check_branch
      %564 = sbr.rel (0) target = $region21
    $region20: #{tpu_custom_call.1} parent=1 // pred_region
      %s566 = ssub.s32 256, 256
      %567 = vsyncadd [#allocation4], %s566
      %s568 = sshll.u32 [#allocation7], 4
      %s569 = int_to_ptr.vmem [resolvable:$true] %s568
      %574 = dma.vmem_to_hbm [thread:$0]  %s569, 256, %s2, [#allocation4], 128, 128, 8
    $region21: #{tpu_custom_call.1} parent=1 // pred_fallthru
      _
    // Predicated region
    $region22: #{tpu_custom_call.1} parent=1 // pred_check
      _
    $region23: #{tpu_custom_call.1} parent=1 // pred_check_branch
      %576 = sbr.rel (0) target = $region25
    $region24: #{tpu_custom_call.1} parent=1 // pred_region
      %577 = dma.done [#allocation4], 256
    $region25: #{tpu_custom_call.1} parent=1 // pred_fallthru
      _
    %578 = vsyncpa [#allocation3], 1
    %579 = vsyncpa [#allocation6], 1
    %580 = vsyncpa [#allocation4], 1

</llo_original>
